<compile_context>
chip_gen: v5e
topology: v5e:2x2
jax: 0.10.0
libtpu: 0.0.40
codegen_flags: <defaults>
</compile_context>

<pallas_src>
import jax
import jax.numpy as jnp
from jax import lax
from jax.experimental import pallas as pl
from jax.experimental.pallas import tpu as pltpu


# ----------------------------------------------------------------------------
# Fused Pallas kernel: whole-batch 2-layer LSTM recurrence
# ----------------------------------------------------------------------------
def _encoder_lstm_kernel(lengths_ref,                 # SMEM (B,) int32 (scalar prefetch)
                         xg0_ref,                     # (B*Lmax, 4H) f32: x @ W_ih0 + b0
                         whh0_ref,                    # (H, 4H) bf16
                         wih1_ref, whh1_ref,          # (H, 4H) bf16 each
                         b1_ref,                      # (1, 4H) f32
                         h0_ref, c0_ref,              # (2, H) f32 initial (hn, cn)
                         y_ref, hn_ref, cn_ref):      # (B*Lmax, H), (2,H), (2,H)
    B = lengths_ref.shape[0]
    H = whh0_ref.shape[0]
    Lmax = y_ref.shape[0] // B

    # Hoist all weight / bias reads out of the timestep loop; they stay
    # register/VMEM resident for the whole recurrence.
    whh0 = whh0_ref[...]
    wih1 = wih1_ref[...]
    whh1 = whh1_ref[...]
    b1 = b1_ref[...]

    def combine(gates, c):
        # One sigmoid over the full 4H-lane gate vector (single EUP pass),
        # tanh only over the H-lane g slice (instead of full-width tanh).
        sig = jax.nn.sigmoid(gates)
        i_g = sig[:, 0 * H:1 * H]
        f_g = sig[:, 1 * H:2 * H]
        o_g = sig[:, 3 * H:4 * H]
        g_g = jnp.tanh(gates[:, 2 * H:3 * H])
        c_new = f_g * c + i_g * g_g
        h_new = o_g * jnp.tanh(c_new)
        return h_new, c_new

    def g0_at(row, h1):
        # Layer-0 gate pre-activation: the input projection was precomputed in
        # the wrapper; only the h-recurrence matmul sits on the serial chain.
        return xg0_ref[pl.ds(row, 1), :] + jnp.dot(
            h1.astype(jnp.bfloat16), whh0, preferred_element_type=jnp.float32)

    def seq_body(i, state):
        h1, c1, h2, c2 = state
        base = i * Lmax
        # Clamp so a bad length cannot read/write the next sequence's rows.
        steps = jnp.minimum(lengths_ref[i] - 1, Lmax - 1)

        # Software pipeline across timesteps: carry the layer-0 gate
        # pre-activation for the *current* step, so layer-0[t+1] and
        # layer-1[t] matmuls are issued back-to-back (independent given h1[t]).
        g0_first = g0_at(base, h1)

        def t_body(t, st):
            g0, h1, c1, h2, c2 = st
            h1n, c1n = combine(g0, c1)
            # Layer-0 matmul for the NEXT step -- independent of layer 1 below.
            g0_next = g0_at(base + t + 1, h1n)
            # Layer 1.  TODO(synk): nn.LSTM inter-layer dropout=0.5 and the
            # module's embedding dropout are train-only; eval-mode identity.
            g1 = (jnp.dot(h1n.astype(jnp.bfloat16), wih1,
                          preferred_element_type=jnp.float32)
                  + jnp.dot(h2.astype(jnp.bfloat16), whh1,
                            preferred_element_type=jnp.float32)
                  + b1)
            h2n, c2n = combine(g1, c2)
            y_ref[pl.ds(base + t, 1), :] = h2n
            return (g0_next, h1n, c1n, h2n, c2n)

        _, h1, c1, h2, c2 = lax.fori_loop(
            0, steps, t_body, (g0_first, h1, c1, h2, c2))
        return (h1, c1, h2, c2)

    # (hn, cn) chain across the batch loop, exactly like the PyTorch forward.
    # Padding rows of y are never read by the wrapper, so no slab init needed.
    state0 = (h0_ref[0:1, :], c0_ref[0:1, :], h0_ref[1:2, :], c0_ref[1:2, :])
    h1, c1, h2, c2 = lax.fori_loop(0, B, seq_body, state0)

    hn_ref[0:1, :] = h1
    hn_ref[1:2, :] = h2
    cn_ref[0:1, :] = c1
    cn_ref[1:2, :] = c2


# ----------------------------------------------------------------------------
# Wrapper: EncoderDescription.forward equivalent
# ----------------------------------------------------------------------------
def encoder_description_forward(params, hidden, captions, lengths):
    """hidden = (hn, cn) each (2, H); captions (B, Lmax) int32; lengths: list.

    Returns (outputs, (hn, cn)) where outputs[i] has shape (lengths[i]-1, H).
    """
    hn0, cn0 = hidden
    B, Lmax = captions.shape
    H = hn0.shape[1]
    E = params['embed'].shape[1]
    p = params['lstm']

    # Embedding lookup (+ dropout, eval-mode identity) stays in plain JAX.
    emb = params['embed'][captions].astype(jnp.float32)      # (B, Lmax, E)
    x = emb.reshape(B * Lmax, E)

    # Layer-0 input projection hoisted OUT of the recurrence kernel: one big
    # (B*Lmax, E) x (E, 4H) matmul XLA schedules on its own (second TC on v7x).
    xg0 = (x @ p['wih0'] + p['b0']).astype(jnp.float32)      # (B*Lmax, 4H)

    # Recurrence weights as bf16 MXU operands (single-pass per-step matmuls);
    # state, biases and accumulation stay f32.
    whh0_bf = p['whh0'].astype(jnp.bfloat16)
    wih1_bf = p['wih1'].astype(jnp.bfloat16)
    whh1_bf = p['whh1'].astype(jnp.bfloat16)

    lengths_arr = jnp.asarray(lengths, dtype=jnp.int32)

    # Full-array VMEM blocks; scalar-prefetch ref is a trailing index_map arg.
    full2d = lambda shape: pl.BlockSpec(shape, lambda g, lens: (0, 0))

    grid_spec = pltpu.PrefetchScalarGridSpec(
        num_scalar_prefetch=1,
        grid=(1,),
        in_specs=[
            full2d((B * Lmax, 4 * H)),
            full2d((H, 4 * H)), full2d((H, 4 * H)), full2d((H, 4 * H)),
            full2d((1, 4 * H)),
            full2d((2, H)), full2d((2, H)),
        ],
        out_specs=[
            full2d((B * Lmax, H)),
            full2d((2, H)), full2d((2, H)),
        ],
    )

    y, hn, cn = pl.pallas_call(
        _encoder_lstm_kernel,
        out_shape=(jax.ShapeDtypeStruct((B * Lmax, H), jnp.float32),
                   jax.ShapeDtypeStruct((2, H), jnp.float32),
                   jax.ShapeDtypeStruct((2, H), jnp.float32)),
        grid_spec=grid_spec,
        compiler_params=pltpu.CompilerParams(
            dimension_semantics=("arbitrary",)),
    )(lengths_arr, xg0, whh0_bf, wih1_bf, whh1_bf, p['b1'], hn0, cn0)

    y = y.reshape(B, Lmax, H)
    outputs = [y[i, :int(l) - 1] for i, l in enumerate(lengths)]
    return outputs, (hn, cn)


# ----------------------------------------------------------------------------
# Synthetic parameters (shapes from EncoderDescription.__init__)
# ----------------------------------------------------------------------------
def init_params(key, vocab_size, embed_size, hidden_size):
    E, H, V = embed_size, hidden_size, vocab_size
    keys = jax.random.split(key, 7)
    nrm = lambda k, shape, s=0.1: (s * jax.random.normal(k, shape)).astype(jnp.float32)
    return dict(
        embed=nrm(keys[0], (V, E), 1.0),
        lstm=dict(
            # weights pre-transposed to (in, 4H); biases = b_ih + b_hh : (1, 4H)
            wih0=nrm(keys[1], (E, 4 * H)), whh0=nrm(keys[2], (H, 4 * H)),
            b0=nrm(keys[3], (1, 4 * H)),
            wih1=nrm(keys[4], (H, 4 * H)), whh1=nrm(keys[5], (H, 4 * H)),
            b1=nrm(keys[6], (1, 4 * H)),
        ),
    )


# ----------------------------------------------------------------------------
# Pure-JAX reference mirroring the kernel's numerics (bf16 recurrence weights,
# f32 accumulation/state) for a tight correctness check of the kernel structure
# (gating, indexing, cross-sequence state chaining).
# ----------------------------------------------------------------------------
def _reference_forward(params, hidden, captions, lengths):
    p = params['lstm']
    H = hidden[0].shape[1]
    emb = params['embed'][captions].astype(jnp.float32)
    whh0 = p['whh0'].astype(jnp.bfloat16)
    wih1 = p['wih1'].astype(jnp.bfloat16)
    whh1 = p['whh1'].astype(jnp.bfloat16)

    def gates_to_hc(g, c):
        i = jax.nn.sigmoid(g[:, :H]); f = jax.nn.sigmoid(g[:, H:2 * H])
        gg = jnp.tanh(g[:, 2 * H:3 * H]); o = jax.nn.sigmoid(g[:, 3 * H:])
        c_new = f * c + i * gg
        return o * jnp.tanh(c_new), c_new

    h1, c1 = hidden[0][0:1], hidden[1][0:1]
    h2, c2 = hidden[0][1:2], hidden[1][1:2]
    outputs = []
    for i, length in enumerate(lengths):
        rows = []
        for t in range(int(length) - 1):
            x_t = emb[i, t:t + 1]
            g0 = (x_t @ p['wih0'] + p['b0']
                  + jnp.dot(h1.astype(jnp.bfloat16), whh0,
                            preferred_element_type=jnp.float32))
            h1, c1 = gates_to_hc(g0, c1)
            g1 = (jnp.dot(h1.astype(jnp.bfloat16), wih1,
                          preferred_element_type=jnp.float32)
                  + jnp.dot(h2.astype(jnp.bfloat16), whh1,
                            preferred_element_type=jnp.float32)
                  + p['b1'])
            h2, c2 = gates_to_hc(g1, c2)
            rows.append(h2)
        outputs.append(jnp.concatenate(rows, axis=0) if rows
                       else jnp.zeros((0, H), jnp.float32))
    return outputs, (jnp.concatenate([h1, h2], 0), jnp.concatenate([c1, c2], 0))


# ----------------------------------------------------------------------------
if __name__ == "__main__":
    key = jax.random.PRNGKey(0)
    E, H, V, B = 32, 32, 48, 4
    lengths = [8, 6, 9, 5]           # all >= 2 (length==1 would be a no-op LSTM)
    Lmax = max(lengths)

    kp, kc, kh, kcc = jax.random.split(key, 4)
    params = init_params(kp, V, E, H)
    captions = jax.random.randint(kc, (B, Lmax), 0, V, jnp.int32)
    hn0 = (0.1 * jax.random.normal(kh, (2, H))).astype(jnp.float32)
    cn0 = (0.1 * jax.random.normal(kcc, (2, H))).astype(jnp.float32)

    outputs, (hn, cn) = encoder_description_forward(
        params, (hn0, cn0), captions, lengths)
    outputs = [jax.block_until_ready(o) for o in outputs]
    hn = jax.block_until_ready(hn)
    cn = jax.block_until_ready(cn)

    ref_out, (ref_hn, ref_cn) = _reference_forward(
        params, (hn0, cn0), captions, lengths)

    for o, r, ln in zip(outputs, ref_out, lengths):
        assert o.shape == (ln - 1, H), (o.shape, ln, H)
        assert o.dtype == jnp.float32
        assert bool(jnp.isfinite(o).all())
        assert bool(jnp.allclose(o, r, rtol=1e-3, atol=1e-3))
    assert hn.shape == (2, H) and cn.shape == (2, H)
    assert bool(jnp.allclose(hn, ref_hn, rtol=1e-3, atol=1e-3))
    assert bool(jnp.allclose(cn, ref_cn, rtol=1e-3, atol=1e-3))

    print("KERNEL_OK")
</pallas_src>

<mosaic_0001>
module attributes {stable_mosaic.version = 11 : i64} {
  func.func @_encoder_lstm_kernel(%arg0: i32, %arg1: memref<4xi32, #tpu.memory_space<smem>>, %arg2: memref<36x128xf32, #tpu.memory_space<vmem>>, %arg3: memref<32x128xbf16, #tpu.memory_space<vmem>>, %arg4: memref<32x128xbf16, #tpu.memory_space<vmem>>, %arg5: memref<32x128xbf16, #tpu.memory_space<vmem>>, %arg6: memref<1x128xf32, #tpu.memory_space<vmem>>, %arg7: memref<2x32xf32, #tpu.memory_space<vmem>>, %arg8: memref<2x32xf32, #tpu.memory_space<vmem>>, %arg9: memref<36x32xf32, #tpu.memory_space<vmem>>, %arg10: memref<2x32xf32, #tpu.memory_space<vmem>>, %arg11: memref<2x32xf32, #tpu.memory_space<vmem>>) attributes {dimension_semantics = [#tpu.dimension_semantics<arbitrary>], iteration_bounds = array<i64: 1>, scalar_prefetch = 1 : i64, scratch_operands = 0 : i64, tpu.core_type = #tpu.core_type<tc>, window_params = [{pipeline_mode = #tpu.pipeline_mode<synchronous>, transform_indices = @transform_0, window_bounds = array<i64: 36, 128>}, {pipeline_mode = #tpu.pipeline_mode<synchronous>, transform_indices = @transform_1, window_bounds = array<i64: 32, 128>}, {pipeline_mode = #tpu.pipeline_mode<synchronous>, transform_indices = @transform_2, window_bounds = array<i64: 32, 128>}, {pipeline_mode = #tpu.pipeline_mode<synchronous>, transform_indices = @transform_3, window_bounds = array<i64: 32, 128>}, {pipeline_mode = #tpu.pipeline_mode<synchronous>, transform_indices = @transform_4, window_bounds = array<i64: 1, 128>}, {pipeline_mode = #tpu.pipeline_mode<synchronous>, transform_indices = @transform_5, window_bounds = array<i64: 2, 32>}, {pipeline_mode = #tpu.pipeline_mode<synchronous>, transform_indices = @transform_6, window_bounds = array<i64: 2, 32>}, {pipeline_mode = #tpu.pipeline_mode<synchronous>, transform_indices = @transform_7, window_bounds = array<i64: 36, 32>}, {pipeline_mode = #tpu.pipeline_mode<synchronous>, transform_indices = @transform_8, window_bounds = array<i64: 2, 32>}, {pipeline_mode = #tpu.pipeline_mode<synchronous>, transform_indices = @transform_9, window_bounds = array<i64: 2, 32>}]} {
    %c0 = arith.constant 0 : index
    %c0_0 = arith.constant 0 : index
    %0 = vector.load %arg3[%c0, %c0_0] : memref<32x128xbf16, #tpu.memory_space<vmem>>, vector<32x128xbf16>
    %c0_1 = arith.constant 0 : index
    %c0_2 = arith.constant 0 : index
    %1 = vector.load %arg4[%c0_1, %c0_2] : memref<32x128xbf16, #tpu.memory_space<vmem>>, vector<32x128xbf16>
    %c0_3 = arith.constant 0 : index
    %c0_4 = arith.constant 0 : index
    %2 = vector.load %arg5[%c0_3, %c0_4] : memref<32x128xbf16, #tpu.memory_space<vmem>>, vector<32x128xbf16>
    %c0_5 = arith.constant 0 : index
    %c0_6 = arith.constant 0 : index
    %3 = vector.load %arg6[%c0_5, %c0_6] : memref<1x128xf32, #tpu.memory_space<vmem>>, vector<1x128xf32>
    %c0_7 = arith.constant 0 : index
    %c0_8 = arith.constant 0 : index
    %4 = vector.load %arg7[%c0_7, %c0_8] : memref<2x32xf32, #tpu.memory_space<vmem>>, vector<1x32xf32>
    %c0_9 = arith.constant 0 : index
    %c0_10 = arith.constant 0 : index
    %5 = vector.load %arg8[%c0_9, %c0_10] : memref<2x32xf32, #tpu.memory_space<vmem>>, vector<1x32xf32>
    %c1 = arith.constant 1 : index
    %c0_11 = arith.constant 0 : index
    %6 = vector.load %arg7[%c1, %c0_11] : memref<2x32xf32, #tpu.memory_space<vmem>>, vector<1x32xf32>
    %c1_12 = arith.constant 1 : index
    %c0_13 = arith.constant 0 : index
    %7 = vector.load %arg8[%c1_12, %c0_13] : memref<2x32xf32, #tpu.memory_space<vmem>>, vector<1x32xf32>
    %c0_i32 = arith.constant 0 : i32
    %c4_i32 = arith.constant 4 : i32
    %8 = arith.addi %c0_i32, %c4_i32 : i32
    %c1_i32 = arith.constant 1 : i32
    %9:4 = scf.for %arg12 = %c0_i32 to %8 step %c1_i32 iter_args(%arg13 = %4, %arg14 = %5, %arg15 = %6, %arg16 = %7) -> (vector<1x32xf32>, vector<1x32xf32>, vector<1x32xf32>, vector<1x32xf32>)  : i32 {
      %c9_i32 = arith.constant 9 : i32
      %14 = arith.muli %arg12, %c9_i32 : i32
      %15 = arith.index_cast %arg12 : i32 to index
      %16 = memref.load %arg1[%15] : memref<4xi32, #tpu.memory_space<smem>>
      %c1_i32_23 = arith.constant 1 : i32
      %17 = arith.subi %16, %c1_i32_23 : i32
      %c8_i32 = arith.constant 8 : i32
      %18 = arith.minsi %17, %c8_i32 : i32
      %19 = arith.index_cast %14 : i32 to index
      %c0_24 = arith.constant 0 : index
      %20 = vector.load %arg2[%19, %c0_24] : memref<36x128xf32, #tpu.memory_space<vmem>>, vector<1x128xf32>
      %21 = arith.truncf %arg13 : vector<1x32xf32> to vector<1x32xbf16>
      %cst = arith.constant dense<0.000000e+00> : vector<1x128xf32>
      %22 = tpu.matmul %21, %0, %cst {dimension_numbers = #tpu.dot_dimension_numbers<[1], [0], [0], [1], [0, 0, 1, 1], [], []>} : vector<1x32xbf16>, vector<32x128xbf16>, vector<1x128xf32> -> vector<1x128xf32>
      %23 = arith.addf %20, %22 : vector<1x128xf32>
      %c0_i32_25 = arith.constant 0 : i32
      %24 = arith.subi %18, %c0_i32_25 : i32
      %25 = arith.addi %c0_i32_25, %24 : i32
      %c1_i32_26 = arith.constant 1 : i32
      %26:5 = scf.for %arg17 = %c0_i32_25 to %25 step %c1_i32_26 iter_args(%arg18 = %23, %arg19 = %arg13, %arg20 = %arg14, %arg21 = %arg15, %arg22 = %arg16) -> (vector<1x128xf32>, vector<1x32xf32>, vector<1x32xf32>, vector<1x32xf32>, vector<1x32xf32>)  : i32 {
        %27 = arith.negf %arg18 : vector<1x128xf32>
        %28 = math.exp %27 : vector<1x128xf32>
        %cst_27 = arith.constant 1.000000e+00 : f32
        %29 = vector.broadcast %cst_27 : f32 to vector<1x128xf32>
        %30 = arith.addf %29, %28 : vector<1x128xf32>
        %31 = arith.divf %29, %30 : vector<1x128xf32>
        %32 = vector.extract_strided_slice %31 {offsets = [0, 0], sizes = [1, 32], strides = [1, 1]} : vector<1x128xf32> to vector<1x32xf32>
        %33 = vector.extract_strided_slice %31 {offsets = [0, 32], sizes = [1, 32], strides = [1, 1]} : vector<1x128xf32> to vector<1x32xf32>
        %34 = vector.extract_strided_slice %31 {offsets = [0, 96], sizes = [1, 32], strides = [1, 1]} : vector<1x128xf32> to vector<1x32xf32>
        %35 = vector.extract_strided_slice %arg18 {offsets = [0, 64], sizes = [1, 32], strides = [1, 1]} : vector<1x128xf32> to vector<1x32xf32>
        %36 = math.tanh %35 : vector<1x32xf32>
        %37 = arith.mulf %33, %arg20 : vector<1x32xf32>
        %38 = arith.mulf %32, %36 : vector<1x32xf32>
        %39 = arith.addf %37, %38 : vector<1x32xf32>
        %40 = math.tanh %39 : vector<1x32xf32>
        %41 = arith.mulf %34, %40 : vector<1x32xf32>
        %42 = arith.addi %14, %arg17 : i32
        %c1_i32_28 = arith.constant 1 : i32
        %43 = arith.addi %42, %c1_i32_28 : i32
        %44 = arith.index_cast %43 : i32 to index
        %c0_29 = arith.constant 0 : index
        %45 = vector.load %arg2[%44, %c0_29] : memref<36x128xf32, #tpu.memory_space<vmem>>, vector<1x128xf32>
        %46 = arith.truncf %41 : vector<1x32xf32> to vector<1x32xbf16>
        %cst_30 = arith.constant dense<0.000000e+00> : vector<1x128xf32>
        %47 = tpu.matmul %46, %0, %cst_30 {dimension_numbers = #tpu.dot_dimension_numbers<[1], [0], [0], [1], [0, 0, 1, 1], [], []>} : vector<1x32xbf16>, vector<32x128xbf16>, vector<1x128xf32> -> vector<1x128xf32>
        %48 = arith.addf %45, %47 : vector<1x128xf32>
        %49 = arith.truncf %41 : vector<1x32xf32> to vector<1x32xbf16>
        %cst_31 = arith.constant dense<0.000000e+00> : vector<1x128xf32>
        %50 = tpu.matmul %49, %1, %cst_31 {dimension_numbers = #tpu.dot_dimension_numbers<[1], [0], [0], [1], [0, 0, 1, 1], [], []>} : vector<1x32xbf16>, vector<32x128xbf16>, vector<1x128xf32> -> vector<1x128xf32>
        %51 = arith.truncf %arg21 : vector<1x32xf32> to vector<1x32xbf16>
        %cst_32 = arith.constant dense<0.000000e+00> : vector<1x128xf32>
        %52 = tpu.matmul %51, %2, %cst_32 {dimension_numbers = #tpu.dot_dimension_numbers<[1], [0], [0], [1], [0, 0, 1, 1], [], []>} : vector<1x32xbf16>, vector<32x128xbf16>, vector<1x128xf32> -> vector<1x128xf32>
        %53 = arith.addf %50, %52 : vector<1x128xf32>
        %54 = arith.addf %53, %3 : vector<1x128xf32>
        %55 = arith.negf %54 : vector<1x128xf32>
        %56 = math.exp %55 : vector<1x128xf32>
        %cst_33 = arith.constant 1.000000e+00 : f32
        %57 = vector.broadcast %cst_33 : f32 to vector<1x128xf32>
        %58 = arith.addf %57, %56 : vector<1x128xf32>
        %59 = arith.divf %57, %58 : vector<1x128xf32>
        %60 = vector.extract_strided_slice %59 {offsets = [0, 0], sizes = [1, 32], strides = [1, 1]} : vector<1x128xf32> to vector<1x32xf32>
        %61 = vector.extract_strided_slice %59 {offsets = [0, 32], sizes = [1, 32], strides = [1, 1]} : vector<1x128xf32> to vector<1x32xf32>
        %62 = vector.extract_strided_slice %59 {offsets = [0, 96], sizes = [1, 32], strides = [1, 1]} : vector<1x128xf32> to vector<1x32xf32>
        %63 = vector.extract_strided_slice %54 {offsets = [0, 64], sizes = [1, 32], strides = [1, 1]} : vector<1x128xf32> to vector<1x32xf32>
        %64 = math.tanh %63 : vector<1x32xf32>
        %65 = arith.mulf %61, %arg22 : vector<1x32xf32>
        %66 = arith.mulf %60, %64 : vector<1x32xf32>
        %67 = arith.addf %65, %66 : vector<1x32xf32>
        %68 = math.tanh %67 : vector<1x32xf32>
        %69 = arith.mulf %62, %68 : vector<1x32xf32>
        %70 = arith.addi %14, %arg17 : i32
        %71 = arith.index_cast %70 : i32 to index
        %c0_34 = arith.constant 0 : index
        %72 = vector.load %arg9[%71, %c0_34] : memref<36x32xf32, #tpu.memory_space<vmem>>, vector<1x32xf32>
        tpu.vector_store %arg9[%71, %c0_34], %69 {strides = array<i32>} : memref<36x32xf32, #tpu.memory_space<vmem>>, vector<1x32xf32>,
        scf.yield %48, %41, %39, %69, %67 : vector<1x128xf32>, vector<1x32xf32>, vector<1x32xf32>, vector<1x32xf32>, vector<1x32xf32>
      }
      scf.yield %26#1, %26#2, %26#3, %26#4 : vector<1x32xf32>, vector<1x32xf32>, vector<1x32xf32>, vector<1x32xf32>
    }
    %c4_i32_14 = arith.constant 4 : i32
    %c0_15 = arith.constant 0 : index
    %c0_16 = arith.constant 0 : index
    %10 = vector.load %arg10[%c0_15, %c0_16] : memref<2x32xf32, #tpu.memory_space<vmem>>, vector<1x32xf32>
    tpu.vector_store %arg10[%c0_15, %c0_16], %9#0 {strides = array<i32>} : memref<2x32xf32, #tpu.memory_space<vmem>>, vector<1x32xf32>,
    %c1_17 = arith.constant 1 : index
    %c0_18 = arith.constant 0 : index
    %11 = vector.load %arg10[%c1_17, %c0_18] : memref<2x32xf32, #tpu.memory_space<vmem>>, vector<1x32xf32>
    tpu.vector_store %arg10[%c1_17, %c0_18], %9#2 {strides = array<i32>} : memref<2x32xf32, #tpu.memory_space<vmem>>, vector<1x32xf32>,
    %c0_19 = arith.constant 0 : index
    %c0_20 = arith.constant 0 : index
    %12 = vector.load %arg11[%c0_19, %c0_20] : memref<2x32xf32, #tpu.memory_space<vmem>>, vector<1x32xf32>
    tpu.vector_store %arg11[%c0_19, %c0_20], %9#1 {strides = array<i32>} : memref<2x32xf32, #tpu.memory_space<vmem>>, vector<1x32xf32>,
    %c1_21 = arith.constant 1 : index
    %c0_22 = arith.constant 0 : index
    %13 = vector.load %arg11[%c1_21, %c0_22] : memref<2x32xf32, #tpu.memory_space<vmem>>, vector<1x32xf32>
    tpu.vector_store %arg11[%c1_21, %c0_22], %9#3 {strides = array<i32>} : memref<2x32xf32, #tpu.memory_space<vmem>>, vector<1x32xf32>,
    return
  }
  func.func @transform_0(%arg0: i32, %arg1: memref<4xi32, #tpu.memory_space<smem>>) -> (i32, i32) {
    %c0_i32 = arith.constant 0 : i32
    %c0_i32_0 = arith.constant 0 : i32
    %c0_i32_1 = arith.constant 0 : i32
    return %c0_i32, %c0_i32_0 : i32, i32
  }
  func.func @transform_1(%arg0: i32, %arg1: memref<4xi32, #tpu.memory_space<smem>>) -> (i32, i32) {
    %c0_i32 = arith.constant 0 : i32
    %c0_i32_0 = arith.constant 0 : i32
    %c0_i32_1 = arith.constant 0 : i32
    return %c0_i32, %c0_i32_0 : i32, i32
  }
  func.func @transform_2(%arg0: i32, %arg1: memref<4xi32, #tpu.memory_space<smem>>) -> (i32, i32) {
    %c0_i32 = arith.constant 0 : i32
    %c0_i32_0 = arith.constant 0 : i32
    %c0_i32_1 = arith.constant 0 : i32
    return %c0_i32, %c0_i32_0 : i32, i32
  }
  func.func @transform_3(%arg0: i32, %arg1: memref<4xi32, #tpu.memory_space<smem>>) -> (i32, i32) {
    %c0_i32 = arith.constant 0 : i32
    %c0_i32_0 = arith.constant 0 : i32
    %c0_i32_1 = arith.constant 0 : i32
    return %c0_i32, %c0_i32_0 : i32, i32
  }
  func.func @transform_4(%arg0: i32, %arg1: memref<4xi32, #tpu.memory_space<smem>>) -> (i32, i32) {
    %c0_i32 = arith.constant 0 : i32
    %c0_i32_0 = arith.constant 0 : i32
    %c0_i32_1 = arith.constant 0 : i32
    return %c0_i32, %c0_i32_0 : i32, i32
  }
  func.func @transform_5(%arg0: i32, %arg1: memref<4xi32, #tpu.memory_space<smem>>) -> (i32, i32) {
    %c0_i32 = arith.constant 0 : i32
    %c0_i32_0 = arith.constant 0 : i32
    %c0_i32_1 = arith.constant 0 : i32
    return %c0_i32, %c0_i32_0 : i32, i32
  }
  func.func @transform_6(%arg0: i32, %arg1: memref<4xi32, #tpu.memory_space<smem>>) -> (i32, i32) {
    %c0_i32 = arith.constant 0 : i32
    %c0_i32_0 = arith.constant 0 : i32
    %c0_i32_1 = arith.constant 0 : i32
    return %c0_i32, %c0_i32_0 : i32, i32
  }
  func.func @transform_7(%arg0: i32, %arg1: memref<4xi32, #tpu.memory_space<smem>>) -> (i32, i32) {
    %c0_i32 = arith.constant 0 : i32
    %c0_i32_0 = arith.constant 0 : i32
    %c0_i32_1 = arith.constant 0 : i32
    return %c0_i32, %c0_i32_0 : i32, i32
  }
  func.func @transform_8(%arg0: i32, %arg1: memref<4xi32, #tpu.memory_space<smem>>) -> (i32, i32) {
    %c0_i32 = arith.constant 0 : i32
    %c0_i32_0 = arith.constant 0 : i32
    %c0_i32_1 = arith.constant 0 : i32
    return %c0_i32, %c0_i32_0 : i32, i32
  }
  func.func @transform_9(%arg0: i32, %arg1: memref<4xi32, #tpu.memory_space<smem>>) -> (i32, i32) {
    %c0_i32 = arith.constant 0 : i32
    %c0_i32_0 = arith.constant 0 : i32
    %c0_i32_1 = arith.constant 0 : i32
    return %c0_i32, %c0_i32_0 : i32, i32
  }
}

</mosaic_0001>

<llo_original>
// kernel: tpu_custom_call.1
$region0: #{tpu_custom_call.1}
  #allocation0 [shape = 'u32[]', space=smem, size = 0x4, offset = 0x4, fixed_abs, tag = 'smem constant byte address 0x4 - core index']
  #allocation1 [shape = 'u32[72,128]{1,0:T(1,128)}', space=vmem, size = 0x9000, scoped, tag = 'internal scratch']
  #allocation2 [shape = 's32[1]{0}', space=sflag, size = 0x4, scoped, tag = 'scoped memory for tpu_custom_call.1']
  #allocation3 [shape = 'u8[512]{0}', space=smem, size = 0x200, scoped, tag = 'prefetched SMEM operand 0']
  %s0 = inlined_call_operand.hbm [shape: s32[4], index: 0, kind: input, shape index: {}]
  %s1 = inlined_call_operand.hbm [shape: f32[36,128], index: 1, kind: input, shape index: {}]
  %s2 = inlined_call_operand.hbm [shape: bf16[32,128], index: 2, kind: input, shape index: {}]
  %s3 = inlined_call_operand.hbm [shape: bf16[32,128], index: 3, kind: input, shape index: {}]
  %s4 = inlined_call_operand.hbm [shape: bf16[32,128], index: 4, kind: input, shape index: {}]
  %s5 = inlined_call_operand.hbm [shape: f32[1,128], index: 5, kind: input, shape index: {}]
  %s6 = inlined_call_operand.vmem [shape: f32[2,32], index: 6, kind: input, shape index: {}]
  %s7 = inlined_call_operand.vmem [shape: f32[2,32], index: 7, kind: input, shape index: {}]
  %s8 = inlined_call_operand.vmem [shape: f32[36,32], index: 8, kind: output, shape index: {0}]
  %s9 = inlined_call_operand.hbm [shape: f32[2,32], index: 9, kind: output, shape index: {1}]
  %s10 = inlined_call_operand.hbm [shape: f32[2,32], index: 10, kind: output, shape index: {2}]
  %11 = xla_tuple %s8, %s9, %s10
  %s12 = sld [smem:[#allocation0]]
  $region88: #{tpu_custom_call.1} parent=0
    _
  %s14 = ssub.s32 1, %s12
  %s15 = scalar_select 0, %s14, %s12
  %s17 = sshll.u32 %s0, 4
  %s18 = int_to_ptr.hbm [resolvable:$true] %s17
  %20 = dma.hbm_to_smem %s18, 16, [#allocation3], [#allocation2]
  %22 = dma.done [#allocation2], 16
  %23 = sfence
  $region1: #{tpu_custom_call.1} parent=0
    #allocation4 [shape = 'u8[20480]{0}', space=vmem, size = 0x5000, scoped, tag = 'input window, operand 1, single buffered']
    #allocation5 [shape = 's32[1]{0}', space=sflag, size = 0x4, scoped, tag = 'scoped memory for tpu_custom_call.1']
    #allocation6 [shape = 's32[1]{0}', space=sflag, size = 0x4, scoped, tag = 'scoped memory for tpu_custom_call.1']
    #allocation7 [shape = 'u8[8192]{0}', space=vmem, size = 0x2000, scoped, tag = 'input window, operand 2, single buffered']
    #allocation8 [shape = 's32[1]{0}', space=sflag, size = 0x4, scoped, tag = 'scoped memory for tpu_custom_call.1']
    #allocation9 [shape = 'u8[8192]{0}', space=vmem, size = 0x2000, scoped, tag = 'input window, operand 3, single buffered']
    #allocation10 [shape = 'u8[8192]{0}', space=vmem, size = 0x2000, scoped, tag = 'input window, operand 4, single buffered']
    #allocation11 [shape = 's32[1]{0}', space=sflag, size = 0x4, scoped, tag = 'scoped memory for tpu_custom_call.1']
    #allocation12 [shape = 'u8[512]{0}', space=vmem, size = 0x400, scoped, tag = 'input window, operand 5, single buffered']
    #allocation13 [shape = 'u8[1024]{0}', space=vmem, size = 0x400, scoped, tag = 'output window, operand 1, single buffered']
    #allocation14 [shape = 'u8[1024]{0}', space=vmem, size = 0x400, scoped, tag = 'output window, operand 2, single buffered']
    #allocation15 [shape = 's32[1]{0}', space=sflag, size = 0x4, scoped, tag = 'scoped memory for tpu_custom_call.1']
    %24 = vsyncpa [#allocation5], 0
    %25 = vsyncpa [#allocation8], 0
    %26 = vsyncpa [#allocation11], 0
    %27 = vsyncpa [#allocation6], 0
    %28 = vsyncpa [#allocation15], 0
    // Predicated region
    $region2: #{tpu_custom_call.1} parent=1 // pred_check
      _
    $region3: #{tpu_custom_call.1} parent=1 // pred_check_branch
      %30 = sbr.rel (0) target = $region5
    $region4: #{tpu_custom_call.1} parent=1 // pred_region
      %32 = vsyncadd [#allocation5], 0
      %s33 = sshll.u32 %s1, 4
      %s34 = int_to_ptr.hbm [resolvable:$true] %s33
      %s35 = sshll.u32 [#allocation4], 4
      %s36 = int_to_ptr.vmem [resolvable:$true] %s35
      %41 = dma.hbm_to_vmem [thread:$0]  %s34, 640, %s36, [#allocation5], 128, 128, 8
    $region5: #{tpu_custom_call.1} parent=1 // pred_fallthru
      _
    // Predicated region
    $region6: #{tpu_custom_call.1} parent=1 // pred_check
      _
    $region7: #{tpu_custom_call.1} parent=1 // pred_check_branch
      %43 = sbr.rel (0) target = $region9
    $region8: #{tpu_custom_call.1} parent=1 // pred_region
      %45 = vsyncadd [#allocation8], 0
      %s46 = sshll.u32 %s2, 4
      %s47 = int_to_ptr.hbm [resolvable:$true] %s46
      %s48 = sshll.u32 [#allocation7], 4
      %s49 = int_to_ptr.vmem [resolvable:$true] %s48
      %54 = dma.hbm_to_vmem [thread:$0]  %s47, 256, %s49, [#allocation8], 64, 64, 4
    $region9: #{tpu_custom_call.1} parent=1 // pred_fallthru
      _
    // Predicated region
    $region10: #{tpu_custom_call.1} parent=1 // pred_check
      _
    $region11: #{tpu_custom_call.1} parent=1 // pred_check_branch
      %56 = sbr.rel (0) target = $region13
    $region12: #{tpu_custom_call.1} parent=1 // pred_region
      %58 = vsyncadd [#allocation8], 0
      %s59 = sshll.u32 %s3, 4
      %s60 = int_to_ptr.hbm [resolvable:$true] %s59
      %s61 = sshll.u32 [#allocation9], 4
      %s62 = int_to_ptr.vmem [resolvable:$true] %s61
      %67 = dma.hbm_to_vmem [thread:$0]  %s60, 256, %s62, [#allocation8], 64, 64, 4
    $region13: #{tpu_custom_call.1} parent=1 // pred_fallthru
      _
    // Predicated region
    $region14: #{tpu_custom_call.1} parent=1 // pred_check
      _
    $region15: #{tpu_custom_call.1} parent=1 // pred_check_branch
      %69 = sbr.rel (0) target = $region17
    $region16: #{tpu_custom_call.1} parent=1 // pred_region
      %71 = vsyncadd [#allocation11], 0
      %s72 = sshll.u32 %s4, 4
      %s73 = int_to_ptr.hbm [resolvable:$true] %s72
      %s74 = sshll.u32 [#allocation10], 4
      %s75 = int_to_ptr.vmem [resolvable:$true] %s74
      %80 = dma.hbm_to_vmem [thread:$0]  %s73, 256, %s75, [#allocation11], 64, 64, 4
    $region17: #{tpu_custom_call.1} parent=1 // pred_fallthru
      _
    // Predicated region
    $region18: #{tpu_custom_call.1} parent=1 // pred_check
      _
    $region19: #{tpu_custom_call.1} parent=1 // pred_check_branch
      %82 = sbr.rel (0) target = $region21
    $region20: #{tpu_custom_call.1} parent=1 // pred_region
      %84 = vsyncadd [#allocation11], 0
      %s86 = sshll.u32 %s5, 4
      %s87 = int_to_ptr.hbm [resolvable:$true] %s86
      %s88 = sshll.u32 [#allocation12], 4
      %s89 = int_to_ptr.vmem [resolvable:$true] %s88
      %91 = dma.hbm_to_vmem [thread:$0]  %s87, 16, %s89, [#allocation11]
    $region21: #{tpu_custom_call.1} parent=1 // pred_fallthru
      _
    // Predicated region
    $region22: #{tpu_custom_call.1} parent=1 // pred_check
      _
    $region23: #{tpu_custom_call.1} parent=1 // pred_check_branch
      %93 = sbr.rel (0) target = $region25
    $region24: #{tpu_custom_call.1} parent=1 // pred_region
      _
    $region25: #{tpu_custom_call.1} parent=1 // pred_fallthru
      _
    // Predicated region
    $region26: #{tpu_custom_call.1} parent=1 // pred_check
      _
    $region27: #{tpu_custom_call.1} parent=1 // pred_check_branch
      %95 = sbr.rel (0) target = $region29
    $region28: #{tpu_custom_call.1} parent=1 // pred_region
      _
    $region29: #{tpu_custom_call.1} parent=1 // pred_fallthru
      _
    // Predicated region
    $region30: #{tpu_custom_call.1} parent=1 // pred_check
      _
    $region31: #{tpu_custom_call.1} parent=1 // pred_check_branch
      %97 = sbr.rel (0) target = $region33
    $region32: #{tpu_custom_call.1} parent=1 // pred_region
      %99 = dma.done [#allocation5], 640
    $region33: #{tpu_custom_call.1} parent=1 // pred_fallthru
      _
    // Predicated region
    $region34: #{tpu_custom_call.1} parent=1 // pred_check
      _
    $region35: #{tpu_custom_call.1} parent=1 // pred_check_branch
      %101 = sbr.rel (0) target = $region37
    $region36: #{tpu_custom_call.1} parent=1 // pred_region
      %103 = dma.done [#allocation8], 256
    $region37: #{tpu_custom_call.1} parent=1 // pred_fallthru
      _
    // Predicated region
    $region38: #{tpu_custom_call.1} parent=1 // pred_check
      _
    $region39: #{tpu_custom_call.1} parent=1 // pred_check_branch
      %105 = sbr.rel (0) target = $region41
    $region40: #{tpu_custom_call.1} parent=1 // pred_region
      %107 = dma.done [#allocation8], 256
    $region41: #{tpu_custom_call.1} parent=1 // pred_fallthru
      _
    // Predicated region
    $region42: #{tpu_custom_call.1} parent=1 // pred_check
      _
    $region43: #{tpu_custom_call.1} parent=1 // pred_check_branch
      %109 = sbr.rel (0) target = $region45
    $region44: #{tpu_custom_call.1} parent=1 // pred_region
      %111 = dma.done [#allocation11], 256
    $region45: #{tpu_custom_call.1} parent=1 // pred_fallthru
      _
    // Predicated region
    $region46: #{tpu_custom_call.1} parent=1 // pred_check
      _
    $region47: #{tpu_custom_call.1} parent=1 // pred_check_branch
      %113 = sbr.rel (0) target = $region49
    $region48: #{tpu_custom_call.1} parent=1 // pred_region
      %115 = dma.done [#allocation11], 16
    $region49: #{tpu_custom_call.1} parent=1 // pred_fallthru
      _
    %v117 = vld [vmem:[#allocation7] sm:$0xf]
    %v118 = vld [vmem:[#allocation7 + $0x4] sm:$0xf]
    %v119 = vld [vmem:[#allocation7 + $0x8] sm:$0xf]
    %v120 = vld [vmem:[#allocation7 + $0xc] sm:$0xf]
    %v121 = vld [vmem:[#allocation9] sm:$0xf]
    %v122 = vld [vmem:[#allocation9 + $0x4] sm:$0xf]
    %v123 = vld [vmem:[#allocation9 + $0x8] sm:$0xf]
    %v124 = vld [vmem:[#allocation9 + $0xc] sm:$0xf]
    %v125 = vld [vmem:[#allocation10] sm:$0xf]
    %v126 = vld [vmem:[#allocation10 + $0x4] sm:$0xf]
    %v127 = vld [vmem:[#allocation10 + $0x8] sm:$0xf]
    %v128 = vld [vmem:[#allocation10 + $0xc] sm:$0xf]
    %v129 = vld [vmem:[#allocation12] sm:$0x1]
    %v130 = vld [vmem:[%s6] sm:$0x1]
    %v131 = vld [vmem:[%s7] sm:$0x1]
    %v132 = vld [vmem:[%s6 + $0x1] sm:$0x1]
    %v133 = vld [vmem:[%s7 + $0x1] sm:$0x1]
    loop: start=0, step=1, limit=4
    $region50: #{tpu_custom_call.1} parent=1 // loop_pre_header
      _
    $region51: #{tpu_custom_call.1} parent=1 // loop_header
      %s135 = sphi 0, %s139
      %p136 = scmp.ge.s32.totalorder %s135, 4
      %v140 = vphi %v130, %v189
      %v141 = vphi %v131, %v190
      %v142 = vphi %v132, %v191
      %v143 = vphi %v133, %v192
    $region52: #{tpu_custom_call.1} parent=1 // loop_header_branch
      %138 = sbr.rel (%p136) target = $region56
    $region53: #{tpu_custom_call.1} parent=1 // loop_body
      %s144 = smul.u32 %s135, 9
      %s145 = sld [smem:[#allocation3 + %s135]]
      %s146 = ssub.s32 %s145, 1
      %p147 = scmp.lt.s32.totalorder %s146, 8
      %s148 = scalar_select %p147, %s146, 8
      %s149 = scalar_lea.vmem [#allocation4], %s144
      %v150 = vld [vmem:[%s149] sm:$0x1]
      %v151 = vpack.c.bf16 %v140, %v140
      %v156 = vunpack.c.l.b16 %v117
      %v157 = vunpack.c.l.b16 %v118
      %v158 = vunpack.c.l.b16 %v119
      %v159 = vunpack.c.l.b16 %v120
      %v160 = vpack.c.b16 %v157, %v156
      %v161 = vpack.c.b16 %v159, %v158
      %vm164 = vcmask 261120
      %v166 = vsel %vm164, %v151, 0
      %168 = vmatpush.bf16.msra.mxu0 0
      %169 = vmatpush.bf16.msra.mxu0 0
      %170 = vmatpush.bf16.msra.mxu0 0
      %171 = vmatpush.bf16.msra.mxu0 0
      %172 = vmatpush.bf16.msra.mxu0 0
      %173 = vmatpush.bf16.msra.mxu0 0
      %174 = vmatpush.bf16.msra.mxu0 %v161
      %175 = vmatpush.bf16.msra.mxu0 %v160
      %176 = vmatmul.bf16.gmra.mxu0 %v166
      %v177 = vpop.f32.mrf.mxu0
      %v178 = vadd.f32 0.0, %v177
      %v179 = vpop.f32.mrf.mxu0
      %180 = vdwg.mxu0
      %v181 = vadd.f32 %v150, %v178
      // While loop
      $region57: #{tpu_custom_call.1} parent=53 // loop_pre_header
        _
      $region58: #{tpu_custom_call.1} parent=53 // loop_header
        %s183 = sphi 0, %s185
        %p184 = scmp.ge.s32.totalorder %s183, %s148
        %v188 = vphi %v181, %v258
        %v189 = vphi %v140, %v364
        %v190 = vphi %v141, %v368
        %v191 = vphi %v142, %v357
        %v192 = vphi %v143, %v372
      $region59: #{tpu_custom_call.1} parent=53 // loop_header_branch
        %187 = sbr.rel (%p184) target = $region63
      $region60: #{tpu_custom_call.1} parent=53 // loop_body
        %v193 = vxor.u32 %v188, 2147483648
        %v194 = vmul.f32 %v193, 1.442695
        %v195 = vpow.pop %v194
        %v196 = vadd.f32 %v195, 1.0
        %v197 = vrcp.pop %v196
        %v198 = vmul.f32 %v196, %v197
        %v199 = vsub.f32 1.0, %v198
        %v200 = vmul.f32 %v197, %v199
        %v201 = vadd.f32 %v197, %v200
        %vm202 = vweird.f32 %v196
        %vm203 = vweird.f32 %v197
        %vm204 = vmor %vm202, %vm203
        %v205 = vsel %vm204, %v197, %v201
        %v206 = vand.u32 2147483647, %v196
        %vm207 = vcmp.eq.f32.partialorder %v206, 8.507059e+37
        %v208 = vand.u32 %v196, 2147483648
        %v209 = vor.u32 1.1754944e-38, %v208
        %v210 = vsel %vm207, %v209, %v205
        %v211 = vmul.f32 1.0, %v210
        %v212 = vtanh.pop %v188
        %214 = vrot.lane.b32.xlu0 %v190, 32
        %v215 = vpop.permute.xlu0 %214
        %v217 = vmul.f32 %v211, %v215
        %219 = vrot.lane.b32.xlu0 %v212, 64
        %v220 = vpop.permute.xlu0 %219
        %v222 = vmul.f32 %v211, %v220
        %224 = vrot.lane.b32.xlu0 %v222, 32
        %v225 = vpop.permute.xlu0 %224
        %v227 = vadd.f32 %v217, %v225
        %v228 = vtanh.pop %v227
        %230 = vrot.lane.b32.xlu0 %v228, 64
        %v231 = vpop.permute.xlu0 %230
        %v233 = vmul.f32 %v211, %v231
        %s234 = sadd.s32 %s144, %s183
        %s235 = sadd.s32 %s234, 1
        %s236 = scalar_lea.vmem [#allocation4], %s235
        %v237 = vld [vmem:[%s236] sm:$0x1]
        %v238 = vpack.c.bf16 %v233, %v233
        %240 = vrot.lane.b32.xlu0 %v238, 32
        %v241 = vpop.permute.xlu0 %240
        %v243 = vsel %vm164, %v241, 0
        %245 = vmatpush.bf16.msra.mxu0 0
        %246 = vmatpush.bf16.msra.mxu0 0
        %247 = vmatpush.bf16.msra.mxu0 0
        %248 = vmatpush.bf16.msra.mxu0 0
        %249 = vmatpush.bf16.msra.mxu0 0
        %250 = vmatpush.bf16.msra.mxu0 0
        %251 = vmatpush.bf16.msra.mxu0 %v161
        %252 = vmatpush.bf16.msra.mxu0 %v160
        %253 = vmatmul.bf16.gmra.mxu0 %v243
        %v254 = vpop.f32.mrf.mxu0
        %v255 = vadd.f32 0.0, %v254
        %v256 = vpop.f32.mrf.mxu0
        %257 = vdwg.mxu0
        %v258 = vadd.f32 %v237, %v255
        %v259 = vpack.c.bf16 %v191, %v191
        %v264 = vunpack.c.l.b16 %v125
        %v265 = vunpack.c.l.b16 %v126
        %v266 = vunpack.c.l.b16 %v127
        %v267 = vunpack.c.l.b16 %v128
        %v268 = vpack.c.b16 %v265, %v264
        %v269 = vpack.c.b16 %v267, %v266
        %v273 = vsel %vm164, %v259, 0
        %275 = vmatpush.bf16.msra.mxu0 0
        %276 = vmatpush.bf16.msra.mxu0 0
        %277 = vmatpush.bf16.msra.mxu0 0
        %278 = vmatpush.bf16.msra.mxu0 0
        %279 = vmatpush.bf16.msra.mxu0 0
        %280 = vmatpush.bf16.msra.mxu0 0
        %281 = vmatpush.bf16.msra.mxu0 %v269
        %282 = vmatpush.bf16.msra.mxu0 %v268
        %283 = vmatmul.bf16.gmra.mxu0 %v273
        %v284 = vpop.f32.mrf.mxu0
        %v285 = vadd.f32 0.0, %v284
        %v286 = vpop.f32.mrf.mxu0
        %287 = vdwg.mxu0
        %v292 = vunpack.c.l.b16 %v121
        %v293 = vunpack.c.l.b16 %v122
        %v294 = vunpack.c.l.b16 %v123
        %v295 = vunpack.c.l.b16 %v124
        %v296 = vpack.c.b16 %v293, %v292
        %v297 = vpack.c.b16 %v295, %v294
        %300 = vmatpush.bf16.msra.mxu0 0
        %301 = vmatpush.bf16.msra.mxu0 0
        %302 = vmatpush.bf16.msra.mxu0 0
        %303 = vmatpush.bf16.msra.mxu0 0
        %304 = vmatpush.bf16.msra.mxu0 0
        %305 = vmatpush.bf16.msra.mxu0 0
        %306 = vmatpush.bf16.msra.mxu0 %v297
        %307 = vmatpush.bf16.msra.mxu0 %v296
        %308 = vmatmul.bf16.gmra.mxu0 %v243
        %v309 = vpop.f32.mrf.mxu0
        %v310 = vadd.f32 %v285, %v309
        %v311 = vpop.f32.mrf.mxu0
        %312 = vdwg.mxu0
        %v313 = vadd.f32 %v310, %v129
        %v314 = vxor.u32 %v313, 2147483648
        %v315 = vmul.f32 %v314, 1.442695
        %v316 = vpow.pop %v315
        %v317 = vadd.f32 %v316, 1.0
        %v318 = vrcp.pop %v317
        %v319 = vmul.f32 %v317, %v318
        %v320 = vsub.f32 1.0, %v319
        %v321 = vmul.f32 %v318, %v320
        %v322 = vadd.f32 %v318, %v321
        %vm323 = vweird.f32 %v317
        %vm324 = vweird.f32 %v318
        %vm325 = vmor %vm323, %vm324
        %v326 = vsel %vm325, %v318, %v322
        %v327 = vand.u32 2147483647, %v317
        %vm328 = vcmp.eq.f32.partialorder %v327, 8.507059e+37
        %v329 = vand.u32 %v317, 2147483648
        %v330 = vor.u32 1.1754944e-38, %v329
        %v331 = vsel %vm328, %v330, %v326
        %v332 = vmul.f32 1.0, %v331
        %v333 = vtanh.pop %v313
        %335 = vrot.lane.b32.xlu0 %v192, 32
        %v336 = vpop.permute.xlu0 %335
        %v338 = vmul.f32 %v332, %v336
        %340 = vrot.lane.b32.xlu0 %v333, 64
        %v341 = vpop.permute.xlu0 %340
        %v343 = vmul.f32 %v332, %v341
        %345 = vrot.lane.b32.xlu0 %v343, 32
        %v346 = vpop.permute.xlu0 %345
        %v348 = vadd.f32 %v338, %v346
        %v349 = vtanh.pop %v348
        %351 = vrot.lane.b32.xlu0 %v349, 64
        %v352 = vpop.permute.xlu0 %351
        %v354 = vmul.f32 %v332, %v352
        %356 = vrot.lane.b32.xlu0 %v354, 32
        %v357 = vpop.permute.xlu0 %356
        %s359 = scalar_lea.vmem %s8, %s234
        %vm360 = vcmask 253952
        %361 = vst.msk [vmem:[%s359] sm:$0x1] %vm360, %v357
        %363 = vrot.lane.b32.xlu0 %v233, 32
        %v364 = vpop.permute.xlu0 %363
        %367 = vrot.lane.b32.xlu0 %v227, 96
        %v368 = vpop.permute.xlu0 %367
        %371 = vrot.lane.b32.xlu0 %v348, 96
        %v372 = vpop.permute.xlu0 %371
      $region61: #{tpu_custom_call.1} parent=53 // loop_footer
        %s185 = sadd.s32 %s183, 1
      $region62: #{tpu_custom_call.1} parent=53 // loop_footer_branch
        %182 = sbr.rel target = $region58
      $region63: #{tpu_custom_call.1} parent=53 // loop_exit
        _
    $region54: #{tpu_custom_call.1} parent=1 // loop_footer
      %s139 = sadd.s32 1, %s135
    $region55: #{tpu_custom_call.1} parent=1 // loop_footer_branch
      %134 = sbr.rel target = $region51
    $region56: #{tpu_custom_call.1} parent=1 // loop_exit
      _
    %vm374 = vcmask 253952
    %375 = vst.msk [vmem:[#allocation13] sm:$0x1] %vm374, %v140
    %376 = vst.msk [vmem:[#allocation13 + $0x1] sm:$0x1] %vm374, %v142
    %377 = vst.msk [vmem:[#allocation14] sm:$0x1] %vm374, %v141
    %378 = vst.msk [vmem:[#allocation14 + $0x1] sm:$0x1] %vm374, %v143
    // Predicated region
    $region64: #{tpu_custom_call.1} parent=1 // pred_check
      _
    $region65: #{tpu_custom_call.1} parent=1 // pred_check_branch
      %380 = sbr.rel (0) target = $region67
    $region66: #{tpu_custom_call.1} parent=1 // pred_region
      _
    $region67: #{tpu_custom_call.1} parent=1 // pred_fallthru
      _
    // Predicated region
    $region68: #{tpu_custom_call.1} parent=1 // pred_check
      _
    $region69: #{tpu_custom_call.1} parent=1 // pred_check_branch
      %382 = sbr.rel (0) target = $region71
    $region70: #{tpu_custom_call.1} parent=1 // pred_region
      %384 = vsyncadd [#allocation6], 0
      %s386 = sshll.u32 [#allocation13], 4
      %s387 = int_to_ptr.vmem [resolvable:$true] %s386
      %s388 = sshll.u32 %s9, 4
      %s389 = int_to_ptr.hbm [resolvable:$true] %s388
      %391 = dma.vmem_to_hbm [thread:$0]  %s387, 32, %s389, [#allocation6]
    $region71: #{tpu_custom_call.1} parent=1 // pred_fallthru
      _
    // Predicated region
    $region72: #{tpu_custom_call.1} parent=1 // pred_check
      _
    $region73: #{tpu_custom_call.1} parent=1 // pred_check_branch
      %393 = sbr.rel (0) target = $region75
    $region74: #{tpu_custom_call.1} parent=1 // pred_region
      %395 = vsyncadd [#allocation15], 0
      %s397 = sshll.u32 [#allocation14], 4
      %s398 = int_to_ptr.vmem [resolvable:$true] %s397
      %s399 = sshll.u32 %s10, 4
      %s400 = int_to_ptr.hbm [resolvable:$true] %s399
      %402 = dma.vmem_to_hbm [thread:$0]  %s398, 32, %s400, [#allocation15]
    $region75: #{tpu_custom_call.1} parent=1 // pred_fallthru
      _
    // Predicated region
    $region76: #{tpu_custom_call.1} parent=1 // pred_check
      _
    $region77: #{tpu_custom_call.1} parent=1 // pred_check_branch
      %404 = sbr.rel (0) target = $region79
    $region78: #{tpu_custom_call.1} parent=1 // pred_region
      _
    $region79: #{tpu_custom_call.1} parent=1 // pred_fallthru
      _
    // Predicated region
    $region80: #{tpu_custom_call.1} parent=1 // pred_check
      _
    $region81: #{tpu_custom_call.1} parent=1 // pred_check_branch
      %406 = sbr.rel (0) target = $region83
    $region82: #{tpu_custom_call.1} parent=1 // pred_region
      %408 = dma.done [#allocation6], 32
    $region83: #{tpu_custom_call.1} parent=1 // pred_fallthru
      _
    // Predicated region
    $region84: #{tpu_custom_call.1} parent=1 // pred_check
      _
    $region85: #{tpu_custom_call.1} parent=1 // pred_check_branch
      %410 = sbr.rel (0) target = $region87
    $region86: #{tpu_custom_call.1} parent=1 // pred_region
      %412 = dma.done [#allocation15], 32
    $region87: #{tpu_custom_call.1} parent=1 // pred_fallthru
      _
    %413 = vsyncpa [#allocation5], 1
    %414 = vsyncpa [#allocation8], 1
    %415 = vsyncpa [#allocation11], 1
    %416 = vsyncpa [#allocation6], 1
    %417 = vsyncpa [#allocation15], 1

</llo_original>
